<compile_context>
chip_gen: v6e
topology: v6e:2x2x1
jax: 0.10.0
libtpu: 0.0.40
codegen_flags: <defaults>
</compile_context>

<pallas_src>
import jax
import jax.numpy as jnp
from jax.experimental import pallas as pl
from jax.experimental.pallas import tpu as pltpu

EPS = 1e-5


# ---------------------------------------------------------------------------
# Kernel
# ---------------------------------------------------------------------------
def head_kernel(x_ref, w1_ref, bng_ref, w2_ref, b2_ref, o_ref):
    # x:   (B, H)   f32 (resident, cast to bf16 in-kernel)
    # w1:  (H, TK)  bf16 column tile
    # bng: (3, TK)  f32 tile -> rows are [b1, gamma, beta]
    # w2:  (TK, H)  bf16 row tile
    # b2:  (1, H)   f32 (resident)
    # o:   (B, H)   f32 (resident accumulator across the reduction axis)
    k = pl.program_id(0)

    @pl.when(k == 0)
    def _init():
        # Seed the accumulator with the output bias -> no finalize pass.
        o_ref[...] = jnp.broadcast_to(b2_ref[...], o_ref.shape)

    # Linear 1 tile (MXU, bf16 x bf16 -> f32 accumulate) + bias + ReLU (VPU).
    xb = x_ref[...].astype(jnp.bfloat16)
    h = jnp.dot(xb, w1_ref[...], preferred_element_type=jnp.float32)
    b1 = bng_ref[0:1, :]
    gamma = bng_ref[1:2, :]
    beta = bng_ref[2:3, :]
    h = jnp.maximum(h + b1, 0.0)                                 # (B, TK) f32

    # BatchNorm1d, training-mode batch statistics (biased variance), per
    # feature -> fully independent per TK tile.  One-pass stats; affine folded
    # into a single per-feature scale so normalization is one FMA / element.
    mu = jnp.mean(h, axis=0, keepdims=True)                      # (1, TK)
    ex2 = jnp.mean(h * h, axis=0, keepdims=True)                 # (1, TK)
    var = jnp.maximum(ex2 - mu * mu, 0.0)                        # biased var
    scale = gamma * jax.lax.rsqrt(var + EPS)                     # (1, TK)
    hn = (h - mu) * scale + beta                                 # (B, TK) f32

    # Linear 2 partial sum over this TK slice of the contraction dimension,
    # accumulated directly into the VMEM-resident output block.
    o_ref[...] += jnp.dot(hn.astype(jnp.bfloat16), w2_ref[...],
                          preferred_element_type=jnp.float32)


# ---------------------------------------------------------------------------
# Chip-aware tiling / VMEM planning
# ---------------------------------------------------------------------------
def _vmem_capacity_bytes():
    try:
        return int(pltpu.get_tpu_info().vmem_capacity_bytes)
    except Exception:
        return 64 << 20  # conservative (v7x per-TensorCore)


def _plan_tiling(B, H, H8, tk=None):
    cap = _vmem_capacity_bytes()
    budget = int(cap * 0.7)

    def bytes_needed(t):
        per_step = H * t * 2 + t * H * 2 + 3 * t * 4          # w1, w2, bn tiles
        resident = B * H * 4 + 2 * B * H * 4 + H * 4          # x, out(+slack), b2
        return 2 * per_step + 2 * resident + (1 << 20)        # dbl-buffer + headroom

    if tk is None:
        for cand in (2048, 1024, 512, 256, 128):
            if H8 % cand == 0 and bytes_needed(cand) <= budget:
                tk = cand
                break
        if tk is None:
            tk = 128 if H8 % 128 == 0 else H8                 # small-shape fallback
    need = bytes_needed(tk)
    vmem_limit = int(min(max(int(1.5 * need), 32 << 20), cap))
    return tk, vmem_limit


# ---------------------------------------------------------------------------
# Parameter preparation (run ONCE, not per forward call)
# ---------------------------------------------------------------------------
def prepare_params(w1, b1, gamma, beta, w2, b2):
    """Cast / fuse parameters into the layout the kernel streams directly."""
    H, H8 = w1.shape
    assert w2.shape == (H8, H)
    w1b = jnp.asarray(w1, jnp.bfloat16)                       # (H, 8H) bf16
    w2b = jnp.asarray(w2, jnp.bfloat16)                       # (8H, H) bf16
    bng = jnp.concatenate([
        jnp.asarray(b1, jnp.float32).reshape(1, H8),
        jnp.asarray(gamma, jnp.float32).reshape(1, H8),
        jnp.asarray(beta, jnp.float32).reshape(1, H8),
    ], axis=0)                                                # (3, 8H) f32
    b2r = jnp.asarray(b2, jnp.float32).reshape(1, H)          # (1, H)  f32
    return w1b, bng, w2b, b2r


# ---------------------------------------------------------------------------
# Forward wrapper
# ---------------------------------------------------------------------------
def head_forward(x, prepared, *, tk=None):
    w1b, bng, w2b, b2r = prepared
    B, H = x.shape
    H8 = w1b.shape[1]
    assert w1b.shape == (H, H8) and w2b.shape == (H8, H) and bng.shape == (3, H8)

    tk, vmem_limit = _plan_tiling(B, H, H8, tk)
    assert H8 % tk == 0, "feature dim 8H must be divisible by the tile size"
    grid = (H8 // tk,)

    # TODO(synk): for large B, BN statistics pin the full batch in VMEM; a
    # two-pass (stats then normalize+matmul) design with a batch grid axis is
    # needed for batch scaling / megacore sharding.
    return pl.pallas_call(
        head_kernel,
        out_shape=jax.ShapeDtypeStruct((B, H), jnp.float32),
        grid_spec=pltpu.PrefetchScalarGridSpec(
            num_scalar_prefetch=0,
            grid=grid,
            in_specs=[
                pl.BlockSpec((B, H), lambda k: (0, 0)),      # x (resident)
                pl.BlockSpec((H, tk), lambda k: (0, k)),     # w1 column tile
                pl.BlockSpec((3, tk), lambda k: (0, k)),     # fused b1/gamma/beta
                pl.BlockSpec((tk, H), lambda k: (k, 0)),     # w2 row tile
                pl.BlockSpec((1, H), lambda k: (0, 0)),      # b2 (resident)
            ],
            out_specs=pl.BlockSpec((B, H), lambda k: (0, 0)),
        ),
        compiler_params=pltpu.CompilerParams(
            dimension_semantics=("arbitrary",),              # K-reduction axis
            vmem_limit_bytes=vmem_limit,
        ),
    )(x, w1b, bng, w2b, b2r)


# ---------------------------------------------------------------------------
# References
# ---------------------------------------------------------------------------
def reference_forward_f32(x, w1, b1, gamma, beta, w2, b2):
    """Pure-f32 reference (exact PyTorch training-mode forward semantics)."""
    h = jnp.maximum(x @ w1 + b1.reshape(1, -1), 0.0)
    mu = jnp.mean(h, axis=0, keepdims=True)
    var = jnp.mean((h - mu) ** 2, axis=0, keepdims=True)
    hn = (h - mu) * jax.lax.rsqrt(var + EPS) * gamma.reshape(1, -1) \
        + beta.reshape(1, -1)
    return hn @ w2 + b2.reshape(1, -1)


def reference_forward_bf16(x, w1, b1, gamma, beta, w2, b2):
    """Reference mirroring the kernel numerics (bf16 MXU operands, f32 stats,
    one-pass variance, folded affine scale)."""
    h = jnp.dot(x.astype(jnp.bfloat16), w1.astype(jnp.bfloat16),
                preferred_element_type=jnp.float32) + b1.reshape(1, -1)
    h = jnp.maximum(h, 0.0)
    mu = jnp.mean(h, axis=0, keepdims=True)
    var = jnp.maximum(jnp.mean(h * h, axis=0, keepdims=True) - mu * mu, 0.0)
    hn = (h - mu) * (gamma.reshape(1, -1) * jax.lax.rsqrt(var + EPS)) \
        + beta.reshape(1, -1)
    return jnp.dot(hn.astype(jnp.bfloat16), w2.astype(jnp.bfloat16),
                   preferred_element_type=jnp.float32) + b2.reshape(1, -1)


def init_params(key, hidden_dim):
    """Deterministic init mimicking PyTorch's uniform(-1/sqrt(fan_in), ...).
    gamma/beta are perturbed from the PyTorch defaults (ones / zeros) so the
    affine path is actually exercised by the correctness check."""
    h8 = hidden_dim * 8
    k1, k2, k3, k4, k5, k6 = jax.random.split(key, 6)
    lim1 = 1.0 / jnp.sqrt(hidden_dim)
    lim2 = 1.0 / jnp.sqrt(h8)
    w1 = jax.random.uniform(k1, (hidden_dim, h8), jnp.float32, -lim1, lim1)
    b1 = jax.random.uniform(k2, (1, h8), jnp.float32, -lim1, lim1)
    w2 = jax.random.uniform(k3, (h8, hidden_dim), jnp.float32, -lim2, lim2)
    b2 = jax.random.uniform(k4, (1, hidden_dim), jnp.float32, -lim2, lim2)
    gamma = 1.0 + 0.1 * jax.random.uniform(k5, (1, h8), jnp.float32, -1.0, 1.0)
    beta = 0.1 * jax.random.uniform(k6, (1, h8), jnp.float32, -1.0, 1.0)
    return w1, b1, gamma, beta, w2, b2


if __name__ == "__main__":
    B = 8            # batch (>= 2 so batch-norm statistics are meaningful)
    hidden_dim = 32  # -> 8H = 256 features

    key = jax.random.PRNGKey(0)
    kx, kp = jax.random.split(key)
    x = jax.random.normal(kx, (B, hidden_dim), jnp.float32)
    params = init_params(kp, hidden_dim)

    # One-time parameter preparation (casts / fusion hoisted out of the call).
    prepared = prepare_params(*params)

    # tk=128 forces a 2-step feature grid so the pipelined in-place output
    # accumulation path is exercised even at this toy size.
    out = head_forward(x, prepared, tk=128)
    out = jax.block_until_ready(out)
    assert out.shape == (B, hidden_dim)

    # Tight-ish check against a reference with matching numerics (bf16 MXU
    # operands, f32 accumulation / statistics).
    ref_bf16 = reference_forward_bf16(x, *params)
    assert jnp.allclose(out, ref_bf16, atol=1e-2, rtol=1e-2), \
        "mismatch vs bf16-mirrored reference"

    # Loose sanity check against the pure-f32 PyTorch-semantics reference
    # (slack accounts only for bf16 matmul rounding).
    ref_f32 = reference_forward_f32(x, *params)
    assert jnp.allclose(out, ref_f32, atol=0.25, rtol=0.25), \
        "mismatch vs f32 reference"

    print("KERNEL_OK")
</pallas_src>

<mosaic_0001>
module attributes {stable_mosaic.version = 11 : i64} {
  func.func @head_kernel(%arg0: i32, %arg1: memref<8x32xf32, #tpu.memory_space<vmem>>, %arg2: memref<32x128xbf16, #tpu.memory_space<vmem>>, %arg3: memref<3x128xf32, #tpu.memory_space<vmem>>, %arg4: memref<128x32xbf16, #tpu.memory_space<vmem>>, %arg5: memref<1x32xf32, #tpu.memory_space<vmem>>, %arg6: memref<8x32xf32, #tpu.memory_space<vmem>>) attributes {dimension_semantics = [#tpu.dimension_semantics<arbitrary>], iteration_bounds = array<i64: 2>, scalar_prefetch = 0 : i64, scratch_operands = 0 : i64, tpu.core_type = #tpu.core_type<tc>, window_params = [{pipeline_mode = #tpu.pipeline_mode<synchronous>, transform_indices = @transform_0, window_bounds = array<i64: 8, 32>}, {transform_indices = @transform_1, window_bounds = array<i64: 32, 128>}, {transform_indices = @transform_2, window_bounds = array<i64: 3, 128>}, {transform_indices = @transform_3, window_bounds = array<i64: 128, 32>}, {pipeline_mode = #tpu.pipeline_mode<synchronous>, transform_indices = @transform_4, window_bounds = array<i64: 1, 32>}, {pipeline_mode = #tpu.pipeline_mode<synchronous>, transform_indices = @transform_5, window_bounds = array<i64: 8, 32>}]} {
    %c0_i32 = arith.constant 0 : i32
    %0 = arith.cmpi eq, %arg0, %c0_i32 : i32
    %1 = arith.extui %0 : i1 to i32
    %c0_i32_0 = arith.constant 0 : i32
    %2 = arith.cmpi ne, %1, %c0_i32_0 : i32
    scf.if %2 {
      %c0_22 = arith.constant 0 : index
      %c0_23 = arith.constant 0 : index
      %43 = vector.load %arg5[%c0_22, %c0_23] : memref<1x32xf32, #tpu.memory_space<vmem>>, vector<1x32xf32>
      %44 = vector.shape_cast %43 : vector<1x32xf32> to vector<1x32xf32>
      %45 = vector.broadcast %44 : vector<1x32xf32> to vector<8x32xf32>
      %c0_24 = arith.constant 0 : index
      %c0_25 = arith.constant 0 : index
      %46 = vector.load %arg6[%c0_24, %c0_25] : memref<8x32xf32, #tpu.memory_space<vmem>>, vector<8x32xf32>
      tpu.vector_store %arg6[%c0_24, %c0_25], %45 {strides = array<i32>} : memref<8x32xf32, #tpu.memory_space<vmem>>, vector<8x32xf32>,
    } else {
    }
    %c0 = arith.constant 0 : index
    %c0_1 = arith.constant 0 : index
    %3 = vector.load %arg1[%c0, %c0_1] : memref<8x32xf32, #tpu.memory_space<vmem>>, vector<8x32xf32>
    %4 = arith.truncf %3 : vector<8x32xf32> to vector<8x32xbf16>
    %c0_2 = arith.constant 0 : index
    %c0_3 = arith.constant 0 : index
    %5 = vector.load %arg2[%c0_2, %c0_3] : memref<32x128xbf16, #tpu.memory_space<vmem>>, vector<32x128xbf16>
    %cst = arith.constant dense<0.000000e+00> : vector<8x128xf32>
    %6 = tpu.matmul %4, %5, %cst {dimension_numbers = #tpu.dot_dimension_numbers<[1], [0], [0], [1], [0, 0, 1, 1], [], []>} : vector<8x32xbf16>, vector<32x128xbf16>, vector<8x128xf32> -> vector<8x128xf32>
    %c0_4 = arith.constant 0 : index
    %c0_5 = arith.constant 0 : index
    %7 = vector.load %arg3[%c0_4, %c0_5] : memref<3x128xf32, #tpu.memory_space<vmem>>, vector<1x128xf32>
    %c1 = arith.constant 1 : index
    %c0_6 = arith.constant 0 : index
    %8 = vector.load %arg3[%c1, %c0_6] : memref<3x128xf32, #tpu.memory_space<vmem>>, vector<1x128xf32>
    %c2 = arith.constant 2 : index
    %c0_7 = arith.constant 0 : index
    %9 = vector.load %arg3[%c2, %c0_7] : memref<3x128xf32, #tpu.memory_space<vmem>>, vector<1x128xf32>
    %10 = vector.broadcast %7 : vector<1x128xf32> to vector<8x128xf32>
    %11 = arith.addf %6, %10 : vector<8x128xf32>
    %cst_8 = arith.constant 0.000000e+00 : f32
    %12 = vector.broadcast %cst_8 : f32 to vector<8x128xf32>
    %13 = arith.maximumf %11, %12 : vector<8x128xf32>
    %cst_9 = arith.constant dense<0.000000e+00> : vector<128xf32>
    %14 = vector.multi_reduction <add>, %13, %cst_9 [0] : vector<8x128xf32> to vector<128xf32>
    %15 = vector.shape_cast %14 : vector<128xf32> to vector<1x128xf32>
    %cst_10 = arith.constant 8.000000e+00 : f32
    %16 = vector.broadcast %cst_10 : f32 to vector<1x128xf32>
    %17 = arith.divf %15, %16 : vector<1x128xf32>
    %18 = arith.mulf %13, %13 : vector<8x128xf32>
    %cst_11 = arith.constant dense<0.000000e+00> : vector<128xf32>
    %19 = vector.multi_reduction <add>, %18, %cst_11 [0] : vector<8x128xf32> to vector<128xf32>
    %20 = vector.shape_cast %19 : vector<128xf32> to vector<1x128xf32>
    %cst_12 = arith.constant 8.000000e+00 : f32
    %21 = vector.broadcast %cst_12 : f32 to vector<1x128xf32>
    %22 = arith.divf %20, %21 : vector<1x128xf32>
    %23 = arith.mulf %17, %17 : vector<1x128xf32>
    %24 = arith.subf %22, %23 : vector<1x128xf32>
    %cst_13 = arith.constant 0.000000e+00 : f32
    %25 = vector.broadcast %cst_13 : f32 to vector<1x128xf32>
    %26 = arith.maximumf %24, %25 : vector<1x128xf32>
    %cst_14 = arith.constant 9.99999974E-6 : f32
    %27 = vector.broadcast %cst_14 : f32 to vector<1x128xf32>
    %28 = arith.addf %26, %27 : vector<1x128xf32>
    %29 = math.rsqrt %28 : vector<1x128xf32>
    %30 = arith.mulf %8, %29 : vector<1x128xf32>
    %31 = vector.broadcast %17 : vector<1x128xf32> to vector<8x128xf32>
    %32 = arith.subf %13, %31 : vector<8x128xf32>
    %33 = vector.broadcast %30 : vector<1x128xf32> to vector<8x128xf32>
    %34 = arith.mulf %32, %33 : vector<8x128xf32>
    %35 = vector.broadcast %9 : vector<1x128xf32> to vector<8x128xf32>
    %36 = arith.addf %34, %35 : vector<8x128xf32>
    %c0_15 = arith.constant 0 : index
    %c0_16 = arith.constant 0 : index
    %37 = vector.load %arg6[%c0_15, %c0_16] : memref<8x32xf32, #tpu.memory_space<vmem>>, vector<8x32xf32>
    %38 = arith.truncf %36 : vector<8x128xf32> to vector<8x128xbf16>
    %c0_17 = arith.constant 0 : index
    %c0_18 = arith.constant 0 : index
    %39 = vector.load %arg4[%c0_17, %c0_18] : memref<128x32xbf16, #tpu.memory_space<vmem>>, vector<128x32xbf16>
    %cst_19 = arith.constant dense<0.000000e+00> : vector<8x32xf32>
    %40 = tpu.matmul %38, %39, %cst_19 {dimension_numbers = #tpu.dot_dimension_numbers<[1], [0], [0], [1], [0, 0, 1, 1], [], []>} : vector<8x128xbf16>, vector<128x32xbf16>, vector<8x32xf32> -> vector<8x32xf32>
    %41 = arith.addf %37, %40 : vector<8x32xf32>
    %c0_20 = arith.constant 0 : index
    %c0_21 = arith.constant 0 : index
    %42 = vector.load %arg6[%c0_20, %c0_21] : memref<8x32xf32, #tpu.memory_space<vmem>>, vector<8x32xf32>
    tpu.vector_store %arg6[%c0_20, %c0_21], %41 {strides = array<i32>} : memref<8x32xf32, #tpu.memory_space<vmem>>, vector<8x32xf32>,
    return
  }
  func.func @transform_0(%arg0: i32) -> (i32, i32) {
    %c0_i32 = arith.constant 0 : i32
    %c0_i32_0 = arith.constant 0 : i32
    %c0_i32_1 = arith.constant 0 : i32
    return %c0_i32, %c0_i32_0 : i32, i32
  }
  func.func @transform_1(%arg0: i32) -> (i32, i32) {
    %c0_i32 = arith.constant 0 : i32
    %c0_i32_0 = arith.constant 0 : i32
    return %c0_i32, %arg0 : i32, i32
  }
  func.func @transform_2(%arg0: i32) -> (i32, i32) {
    %c0_i32 = arith.constant 0 : i32
    %c0_i32_0 = arith.constant 0 : i32
    return %c0_i32, %arg0 : i32, i32
  }
  func.func @transform_3(%arg0: i32) -> (i32, i32) {
    %c0_i32 = arith.constant 0 : i32
    %c0_i32_0 = arith.constant 0 : i32
    return %arg0, %c0_i32 : i32, i32
  }
  func.func @transform_4(%arg0: i32) -> (i32, i32) {
    %c0_i32 = arith.constant 0 : i32
    %c0_i32_0 = arith.constant 0 : i32
    %c0_i32_1 = arith.constant 0 : i32
    return %c0_i32, %c0_i32_0 : i32, i32
  }
  func.func @transform_5(%arg0: i32) -> (i32, i32) {
    %c0_i32 = arith.constant 0 : i32
    %c0_i32_0 = arith.constant 0 : i32
    %c0_i32_1 = arith.constant 0 : i32
    return %c0_i32, %c0_i32_0 : i32, i32
  }
}

</mosaic_0001>

<llo_original>
// kernel: tpu_custom_call.1
$region0: #{tpu_custom_call.1}
  #allocation0 [shape = 'u32[]', space=smem, size = 0x4, offset = 0x4, fixed_abs, tag = 'smem constant byte address 0x4 - core index']
  #allocation1 [shape = 'u32[144,128]{1,0:T(1,128)}', space=vmem, size = 0x12000, scoped, tag = 'internal scratch']
  %s0 = inlined_call_operand.vmem [shape: f32[8,32], index: 0, kind: input, shape index: {}]
  %s1 = inlined_call_operand.vmem [shape: bf16[32,256], index: 1, kind: input, shape index: {}]
  %s2 = inlined_call_operand.vmem [shape: f32[3,256], index: 2, kind: input, shape index: {}]
  %s3 = inlined_call_operand.vmem [shape: bf16[256,32], index: 3, kind: input, shape index: {}]
  %s4 = inlined_call_operand.vmem [shape: f32[1,32], index: 4, kind: input, shape index: {}]
  %s5 = inlined_call_operand.hbm [shape: f32[8,32], index: 5, kind: output, shape index: {}]
  %s6 = sld [smem:[#allocation0]]
  $region98: #{tpu_custom_call.1} parent=0
    _
  %s8 = ssub.s32 1, %s6
  %s9 = scalar_select 0, %s8, %s6
  $region1: #{tpu_custom_call.1} parent=0
    #allocation2 [shape = 'u8[16384]{0}', space=vmem, size = 0x4000, scoped, tag = 'input window, operand 1']
    #allocation3 [shape = 'u8[4096]{0}', space=vmem, size = 0x1000, scoped, tag = 'output window, operand 0, single buffered']
    #allocation4 [shape = 's32[2]{0}', space=sflag, size = 0x8, scoped, tag = 'scoped memory for tpu_custom_call.1']
    %10 = vsyncpa [#allocation4], 0
    loop: start=0, step=1, limit=4
    $region2: #{tpu_custom_call.1} parent=1 // loop_pre_header
      _
    $region3: #{tpu_custom_call.1} parent=1 // loop_header
      %s12 = sphi 0, %s16
      %p13 = scmp.ge.s32.totalorder %s12, 4
      %s20 = sphi 0, %s20
      %s22 = sphi 0, %s20
      %s23 = sphi 0, %s22
      %s37 = sphi 0, %s23
      %s43 = sphi 0, %s45
      %s46 = sphi 0, %s43
      %s47 = sphi 0, %s46
      %s63 = sphi 0, %s47
      %s69 = sphi 0, %s71
      %s72 = sphi 0, %s69
      %s73 = sphi 0, %s72
      %s89 = sphi 0, %s73
      %s95 = sphi 0, %s97
      %s98 = sphi 0, %s95
      %s99 = sphi 0, %s98
      %s115 = sphi 0, %s99
      %s119 = sphi 0, %s119
      %s121 = sphi 0, %s119
      %s122 = sphi 0, %s121
      %s136 = sphi 0, %s122
      %s140 = sphi 0, %s140
      %s142 = sphi 0, %s140
      %s143 = sphi 0, %s142
      %s157 = sphi 0, %s143
    $region4: #{tpu_custom_call.1} parent=1 // loop_header_branch
      %15 = sbr.rel (%p13) target = $region8
    $region5: #{tpu_custom_call.1} parent=1 // loop_body
      %s17 = ssub.s32 %s12, 1
      %s18 = ssub.s32 %s12, 2
      %s19 = sadd.s32 %s12, 1
      %s21 = sadd.s32 %s20, 1
      %p24 = scmp.eq.s32.totalorder %s12, 1
      %p25 = scmp.ne.s32.totalorder %s20, %s22
      %p26 = scmp.eq.s32.totalorder %s12, 0
      %p27 = por %p25, %p26
      %p28 = scmp.ne.s32.totalorder %s20, %s22
      %p29 = scmp.eq.s32.totalorder %s17, 1
      %p30 = por %p28, %p29
      %p31 = scmp.ne.s32.totalorder %s22, %s23
      %p32 = scmp.eq.s32.totalorder %s17, 0
      %p33 = por %p31, %p32
      %p34 = scmp.ne.s32.totalorder %s22, %s23
      %p35 = scmp.eq.s32.totalorder %s18, 1
      %p36 = por %p34, %p35
      %p38 = scmp.ne.s32.totalorder %s23, %s37
      %p39 = scmp.eq.s32.totalorder %s18, 0
      %p40 = por %p38, %p39
      %s41 = ssub.s32 %s12, %s19
      %p42 = scmp.eq.s32.totalorder %s41, 0
      %s44 = sadd.s32 %s43, 1
      %s45 = scalar_select %p42, %s43, %s44
      %p48 = pneg %p42
      %p49 = scmp.eq.s32.totalorder %s12, 1
      %p50 = por %p48, %p49
      %p51 = scmp.ne.s32.totalorder %s43, %s46
      %p52 = scmp.eq.s32.totalorder %s12, 0
      %p53 = por %p51, %p52
      %p54 = scmp.ne.s32.totalorder %s43, %s46
      %p55 = scmp.eq.s32.totalorder %s17, 1
      %p56 = por %p54, %p55
      %p57 = scmp.ne.s32.totalorder %s46, %s47
      %p58 = scmp.eq.s32.totalorder %s17, 0
      %p59 = por %p57, %p58
      %p60 = scmp.ne.s32.totalorder %s46, %s47
      %p61 = scmp.eq.s32.totalorder %s18, 1
      %p62 = por %p60, %p61
      %p64 = scmp.ne.s32.totalorder %s47, %s63
      %p65 = scmp.eq.s32.totalorder %s18, 0
      %p66 = por %p64, %p65
      %s67 = ssub.s32 %s12, %s19
      %p68 = scmp.eq.s32.totalorder %s67, 0
      %s70 = sadd.s32 %s69, 1
      %s71 = scalar_select %p68, %s69, %s70
      %p74 = pneg %p68
      %p75 = scmp.eq.s32.totalorder %s12, 1
      %p76 = por %p74, %p75
      %p77 = scmp.ne.s32.totalorder %s69, %s72
      %p78 = scmp.eq.s32.totalorder %s12, 0
      %p79 = por %p77, %p78
      %p80 = scmp.ne.s32.totalorder %s69, %s72
      %p81 = scmp.eq.s32.totalorder %s17, 1
      %p82 = por %p80, %p81
      %p83 = scmp.ne.s32.totalorder %s72, %s73
      %p84 = scmp.eq.s32.totalorder %s17, 0
      %p85 = por %p83, %p84
      %p86 = scmp.ne.s32.totalorder %s72, %s73
      %p87 = scmp.eq.s32.totalorder %s18, 1
      %p88 = por %p86, %p87
      %p90 = scmp.ne.s32.totalorder %s73, %s89
      %p91 = scmp.eq.s32.totalorder %s18, 0
      %p92 = por %p90, %p91
      %s93 = ssub.s32 %s12, %s19
      %p94 = scmp.eq.s32.totalorder %s93, 0
      %s96 = sadd.s32 %s95, 1
      %s97 = scalar_select %p94, %s95, %s96
      %p100 = pneg %p94
      %p101 = scmp.eq.s32.totalorder %s12, 1
      %p102 = por %p100, %p101
      %p103 = scmp.ne.s32.totalorder %s95, %s98
      %p104 = scmp.eq.s32.totalorder %s12, 0
      %p105 = por %p103, %p104
      %p106 = scmp.ne.s32.totalorder %s95, %s98
      %p107 = scmp.eq.s32.totalorder %s17, 1
      %p108 = por %p106, %p107
      %p109 = scmp.ne.s32.totalorder %s98, %s99
      %p110 = scmp.eq.s32.totalorder %s17, 0
      %p111 = por %p109, %p110
      %p112 = scmp.ne.s32.totalorder %s98, %s99
      %p113 = scmp.eq.s32.totalorder %s18, 1
      %p114 = por %p112, %p113
      %p116 = scmp.ne.s32.totalorder %s99, %s115
      %p117 = scmp.eq.s32.totalorder %s18, 0
      %p118 = por %p116, %p117
      %s120 = sadd.s32 %s119, 1
      %p123 = scmp.eq.s32.totalorder %s12, 1
      %p124 = scmp.ne.s32.totalorder %s119, %s121
      %p125 = scmp.eq.s32.totalorder %s12, 0
      %p126 = por %p124, %p125
      %p127 = scmp.ne.s32.totalorder %s119, %s121
      %p128 = scmp.eq.s32.totalorder %s17, 1
      %p129 = por %p127, %p128
      %p130 = scmp.ne.s32.totalorder %s121, %s122
      %p131 = scmp.eq.s32.totalorder %s17, 0
      %p132 = por %p130, %p131
      %p133 = scmp.ne.s32.totalorder %s121, %s122
      %p134 = scmp.eq.s32.totalorder %s18, 1
      %p135 = por %p133, %p134
      %p137 = scmp.ne.s32.totalorder %s122, %s136
      %p138 = scmp.eq.s32.totalorder %s18, 0
      %p139 = por %p137, %p138
      %s141 = sadd.s32 %s140, 1
      %p144 = scmp.eq.s32.totalorder %s12, 1
      %p145 = scmp.ne.s32.totalorder %s140, %s142
      %p146 = scmp.eq.s32.totalorder %s12, 0
      %p147 = por %p145, %p146
      %p148 = scmp.ne.s32.totalorder %s140, %s142
      %p149 = scmp.eq.s32.totalorder %s17, 1
      %p150 = por %p148, %p149
      %p151 = scmp.ne.s32.totalorder %s142, %s143
      %p152 = scmp.eq.s32.totalorder %s17, 0
      %p153 = por %p151, %p152
      %p154 = scmp.ne.s32.totalorder %s142, %s143
      %p155 = scmp.eq.s32.totalorder %s18, 1
      %p156 = por %p154, %p155
      %p158 = scmp.ne.s32.totalorder %s143, %s157
      %p159 = scmp.eq.s32.totalorder %s18, 0
      %p160 = por %p158, %p159
      %p161 = scmp.le.s32.totalorder 1, %s12
      %p162 = scmp.lt.s32.totalorder %s12, 3
      %p163 = pnand %p161, %p162
      %p164 = pneg %p163
      // Predicated region
      $region9: #{tpu_custom_call.1} parent=5 // pred_check
        _
      $region10: #{tpu_custom_call.1} parent=5 // pred_check_branch
        %166 = sbr.rel (%p163) target = $region12
      $region11: #{tpu_custom_call.1} parent=5 // pred_region
        %s167 = ssub.s32 %s12, 1
        // Predicated region
        $region13: #{tpu_custom_call.1} parent=11 // pred_check
          %p168 = pneg %p33
        $region14: #{tpu_custom_call.1} parent=11 // pred_check_branch
          %170 = sbr.rel (%p168) target = $region16
        $region15: #{tpu_custom_call.1} parent=11 // pred_region
          _
        $region16: #{tpu_custom_call.1} parent=11 // pred_fallthru
          _
        // Predicated region
        $region17: #{tpu_custom_call.1} parent=11 // pred_check
          %p171 = pneg %p132
        $region18: #{tpu_custom_call.1} parent=11 // pred_check_branch
          %173 = sbr.rel (%p171) target = $region20
        $region19: #{tpu_custom_call.1} parent=11 // pred_region
          _
        $region20: #{tpu_custom_call.1} parent=11 // pred_fallthru
          _
      $region12: #{tpu_custom_call.1} parent=5 // pred_fallthru
        _
      %p174 = scmp.lt.s32.totalorder %s12, 2
      // Predicated region
      $region21: #{tpu_custom_call.1} parent=5 // pred_check
        %p175 = pneg %p174
      $region22: #{tpu_custom_call.1} parent=5 // pred_check_branch
        %177 = sbr.rel (%p175) target = $region24
      $region23: #{tpu_custom_call.1} parent=5 // pred_region
        // Predicated region
        $region25: #{tpu_custom_call.1} parent=23 // pred_check
          %p178 = pneg %p53
        $region26: #{tpu_custom_call.1} parent=23 // pred_check_branch
          %180 = sbr.rel (%p178) target = $region28
        $region27: #{tpu_custom_call.1} parent=23 // pred_region
          %s181 = sand.u32 %s43, 1
          %s182 = sand.u32 %s43, 1
          %s183 = smul.addr %s182, 16
          %s184 = scalar_lea.vmem [#allocation2], %s183
          %s185 = smul.addr %s12, 4
          %s186 = scalar_lea.vmem %s1, %s185
          // Predicated region
          $region29: #{tpu_custom_call.1} parent=27 // pred_check
            _
          $region30: #{tpu_custom_call.1} parent=27 // pred_check_branch
            %188 = sbr.rel (0) target = $region32
          $region31: #{tpu_custom_call.1} parent=27 // pred_region
            // Predicated region
            $region33: #{tpu_custom_call.1} parent=31 // pred_check
              _
            $region34: #{tpu_custom_call.1} parent=31 // pred_check_branch
              %190 = sbr.rel target = $region36
            $region35: #{tpu_custom_call.1} parent=31 // pred_region
              // Predicated region
              $region48: #{tpu_custom_call.1} parent=35 // pred_check
                _
              $region49: #{tpu_custom_call.1} parent=35 // pred_check_branch
                %212 = sbr.rel (0) target = $region51
              $region50: #{tpu_custom_call.1} parent=35 // pred_region
                loop: start=0, step=1, limit=1
                $region52: #{tpu_custom_call.1} parent=50 // loop_pre_header
                  _
                $region53: #{tpu_custom_call.1} parent=50 // loop_header
                  %s214 = sphi 0, %s218
                  %p215 = scmp.ge.s32.totalorder %s214, 1
                  %s219 = sphi %s186, %s186
                  %s220 = sphi %s184, %s184
                $region54: #{tpu_custom_call.1} parent=50 // loop_header_branch
                  %217 = sbr.rel (%p215) target = $region58
                $region55: #{tpu_custom_call.1} parent=50 // loop_body
                  _
                $region56: #{tpu_custom_call.1} parent=50 // loop_footer
                  %s218 = sadd.s32 1, %s214
                $region57: #{tpu_custom_call.1} parent=50 // loop_footer_branch
                  %213 = sbr.rel target = $region53
                $region58: #{tpu_custom_call.1} parent=50 // loop_exit
                  _
                %s222 = ssub.s32 16, 1
                loop: start=0, step=1, limit=1
                $region59: #{tpu_custom_call.1} parent=50 // loop_pre_header
                  _
                $region60: #{tpu_custom_call.1} parent=50 // loop_header
                  %s224 = sphi 0, %s228
                  %p225 = scmp.ge.s32.totalorder %s224, 1
                  %s229 = sphi %s186, %s186
                  %s230 = sphi %s184, %s184
                $region61: #{tpu_custom_call.1} parent=50 // loop_header_branch
                  %227 = sbr.rel (%p225) target = $region65
                $region62: #{tpu_custom_call.1} parent=50 // loop_body
                  %v231 = vld [vmem:[%s229] sm:%s222]
                  %232 = vst [vmem:[%s230] sm:%s222] %v231
                  %v233 = vld [vmem:[%s229 + $0x8] sm:%s222]
                  %234 = vst [vmem:[%s230 + $0x4] sm:%s222] %v233
                  %v235 = vld [vmem:[%s229 + $0x10] sm:%s222]
                  %236 = vst [vmem:[%s230 + $0x8] sm:%s222] %v235
                  %v237 = vld [vmem:[%s229 + $0x18] sm:%s222]
                  %238 = vst [vmem:[%s230 + $0xc] sm:%s222] %v237
                $region63: #{tpu_custom_call.1} parent=50 // loop_footer
                  %s228 = sadd.s32 1, %s224
                $region64: #{tpu_custom_call.1} parent=50 // loop_footer_branch
                  %223 = sbr.rel target = $region60
                $region65: #{tpu_custom_call.1} parent=50 // loop_exit
                  _
              $region51: #{tpu_custom_call.1} parent=35 // pred_fallthru
                _
            $region36: #{tpu_custom_call.1} parent=31 // pred_fallthru
              _
            // Predicated region
            $region37: #{tpu_custom_call.1} parent=31 // pred_check
              _
            $region38: #{tpu_custom_call.1} parent=31 // pred_check_branch
              %192 = sbr.rel (0) target = $region40
            $region39: #{tpu_custom_call.1} parent=31 // pred_region
              %s194 = ssub.s32 16, 1
              loop: start=0, step=1, limit=1
              $region41: #{tpu_custom_call.1} parent=39 // loop_pre_header
                _
              $region42: #{tpu_custom_call.1} parent=39 // loop_header
                %s196 = sphi 0, %s200
                %p197 = scmp.ge.s32.totalorder %s196, 1
                %s201 = sphi %s186, %s186
                %s202 = sphi %s184, %s184
              $region43: #{tpu_custom_call.1} parent=39 // loop_header_branch
                %199 = sbr.rel (%p197) target = $region47
              $region44: #{tpu_custom_call.1} parent=39 // loop_body
                %v203 = vld [vmem:[%s201] sm:%s194]
                %204 = vst [vmem:[%s202] sm:%s194] %v203
                %v205 = vld [vmem:[%s201 + $0x8] sm:%s194]
                %206 = vst [vmem:[%s202 + $0x4] sm:%s194] %v205
                %v207 = vld [vmem:[%s201 + $0x10] sm:%s194]
                %208 = vst [vmem:[%s202 + $0x8] sm:%s194] %v207
                %v209 = vld [vmem:[%s201 + $0x18] sm:%s194]
                %210 = vst [vmem:[%s202 + $0xc] sm:%s194] %v209
              $region45: #{tpu_custom_call.1} parent=39 // loop_footer
                %s200 = sadd.s32 1, %s196
              $region46: #{tpu_custom_call.1} parent=39 // loop_footer_branch
                %195 = sbr.rel target = $region42
              $region47: #{tpu_custom_call.1} parent=39 // loop_exit
                _
            $region40: #{tpu_custom_call.1} parent=31 // pred_fallthru
              _
          $region32: #{tpu_custom_call.1} parent=27 // pred_fallthru
            _
          %239 = vnop
        $region28: #{tpu_custom_call.1} parent=23 // pred_fallthru
          _
        // Predicated region
        $region66: #{tpu_custom_call.1} parent=23 // pred_check
          %p240 = pneg %p79
        $region67: #{tpu_custom_call.1} parent=23 // pred_check_branch
          %242 = sbr.rel (%p240) target = $region69
        $region68: #{tpu_custom_call.1} parent=23 // pred_region
          %p243 = scmp.lt.s32.totalorder %s12, 1
          %s244 = scalar_select %p243, %s12, 1
          %s245 = smul.addr %s244, 4
          %s246 = scalar_lea.vmem %s2, %s245
        $region69: #{tpu_custom_call.1} parent=23 // pred_fallthru
          _
        // Predicated region
        $region70: #{tpu_custom_call.1} parent=23 // pred_check
          %p247 = pneg %p105
        $region71: #{tpu_custom_call.1} parent=23 // pred_check_branch
          %249 = sbr.rel (%p247) target = $region73
        $region72: #{tpu_custom_call.1} parent=23 // pred_region
          %s250 = smul.u32 16, %s12
          %p251 = scmp.lt.s32.totalorder %s250, 31
          %s252 = scalar_select %p251, %s250, 31
          %s253 = smul.addr %s252, 4
          %s254 = scalar_lea.vmem %s3, %s253
          %s255 = smul.u32 16, %s12
        $region73: #{tpu_custom_call.1} parent=23 // pred_fallthru
          _
      $region24: #{tpu_custom_call.1} parent=5 // pred_fallthru
        _
      %p256 = scmp.le.s32.totalorder 1, %s12
      %p257 = scmp.lt.s32.totalorder %s12, 3
      %p258 = pnand %p256, %p257
      %p259 = pneg %p258
      // Predicated region
      $region74: #{tpu_custom_call.1} parent=5 // pred_check
        _
      $region75: #{tpu_custom_call.1} parent=5 // pred_check_branch
        %261 = sbr.rel (%p258) target = $region77
      $region76: #{tpu_custom_call.1} parent=5 // pred_region
        %s262 = ssub.s32 %s12, 1
        %s263 = sand.u32 %s46, 1
        %s264 = sand.u32 %s46, 1
        %s265 = smul.addr %s264, 16
        %s266 = scalar_lea.vmem [#allocation2], %s265
        // Predicated region
        $region78: #{tpu_custom_call.1} parent=76 // pred_check
          %p267 = pneg %p59
        $region79: #{tpu_custom_call.1} parent=76 // pred_check_branch
          %269 = sbr.rel (%p267) target = $region81
        $region80: #{tpu_custom_call.1} parent=76 // pred_region
          _
        $region81: #{tpu_custom_call.1} parent=76 // pred_fallthru
          _
        %p270 = pneg %p33
        %p271 = pneg %p30
        %s272 = sand.u32 %s46, 1
        %s273 = sand.u32 %s46, 1
        %s274 = smul.addr %s273, 16
        %s275 = scalar_lea.vmem [#allocation2], %s274
        %p276 = pneg %p59
        %p277 = pneg %p56
        %p278 = scmp.lt.s32.totalorder %s17, 1
        %s279 = scalar_select %p278, %s17, 1
        %s280 = smul.addr %s279, 4
        %s281 = scalar_lea.vmem %s2, %s280
        %p282 = pneg %p85
        %p283 = pneg %p82
        %s284 = smul.u32 16, %s17
        %p285 = scmp.lt.s32.totalorder %s284, 31
        %s286 = scalar_select %p285, %s284, 31
        %s287 = smul.addr %s286, 4
        %s288 = scalar_lea.vmem %s3, %s287
        %p289 = pneg %p111
        %p290 = pneg %p108
        %p291 = pneg %p132
        %p292 = pneg %p129
        %p293 = pneg %p153
        %p294 = pneg %p150
        %p295 = scmp.lt.s32.totalorder %s17, 1
        %s296 = scalar_select %p295, %s17, 1
        %s297 = smul.addr %s296, 4
        %s298 = scalar_lea.vmem %s2, %s297
        %s299 = smul.u32 16, %s17
        %p300 = scmp.lt.s32.totalorder %s299, 31
        %s301 = scalar_select %p300, %s299, 31
        %s302 = smul.addr %s301, 4
        %s303 = scalar_lea.vmem %s3, %s302
        %s304 = smul.u32 16, %s17
        %p306 = scmp.eq.s32.totalorder %s17, 0
        // Predicated region
        $region82: #{tpu_custom_call.1} parent=76 // pred_check
          %p307 = pneg %p306
        $region83: #{tpu_custom_call.1} parent=76 // pred_check_branch
          %309 = sbr.rel (%p307) target = $region85
        $region84: #{tpu_custom_call.1} parent=76 // pred_region
          %v310 = vld [vmem:[%s4] sm:$0x1]
          %v312 = vlaneseq
          %v313 = vshrl.u32 %v312, 7
          %v314 = vsub.s32 0, %v313
          %v315 = vrot.slane %v310, %v314
          %vm317 = vcmask 261120
          %318 = vst.msk [vmem:[#allocation3] sm:$0xff] %vm317, %v315
        $region85: #{tpu_custom_call.1} parent=76 // pred_fallthru
          _
        %v319 = vld [vmem:[%s0] sm:$0xff]
        %v320 = vpack.c.bf16 %v319, %v319
        %v321 = vld [vmem:[%s266] sm:$0xf]
        %v322 = vld [vmem:[%s266 + $0x4] sm:$0xf]
        %v323 = vld [vmem:[%s266 + $0x8] sm:$0xf]
        %v324 = vld [vmem:[%s266 + $0xc] sm:$0xf]
        %v325 = vld [vmem:[%s298] sm:$0x1]
        %v326 = vld [vmem:[%s298 + $0x1] sm:$0x1]
        %v327 = vld [vmem:[%s298 + $0x2] sm:$0x1]
        %v328 = vlaneseq
        %v329 = vshrl.u32 %v328, 7
        %v330 = vsub.s32 0, %v329
        %v331 = vrot.slane %v325, %v330
        %v336 = vunpack.c.l.b16 %v321
        %v337 = vunpack.c.l.b16 %v322
        %v338 = vunpack.c.l.b16 %v323
        %v339 = vunpack.c.l.b16 %v324
        %v340 = vpack.c.b16 %v337, %v336
        %v341 = vpack.c.b16 %v339, %v338
        %vm344 = vcmask 261120
        %v346 = vsel %vm344, %v320, 0
        %348 = vmatprep.subr.bf16.mxu0 0
        %349 = vmatpush1.bf16.msra.mxu0 0
        %350 = vmatprep.subr.bf16.mxu0 0
        %351 = vmatpush1.bf16.msra.mxu0 0
        %352 = vmatprep.subr.bf16.mxu0 0
        %353 = vmatpush1.bf16.msra.mxu0 0
        %354 = vmatprep.subr.bf16.mxu0 0
        %355 = vmatpush1.bf16.msra.mxu0 0
        %356 = vmatprep.subr.bf16.mxu0 0
        %357 = vmatpush1.bf16.msra.mxu0 0
        %358 = vmatprep.subr.bf16.mxu0 0
        %359 = vmatpush1.bf16.msra.mxu0 0
        %360 = vmatprep.subr.bf16.mxu0 0
        %361 = vmatpush1.bf16.msra.mxu0 %v341
        %362 = vmatprep.subr.bf16.mxu0 0
        %363 = vmatpush1.bf16.msra.mxu0 %v340
        %364 = vmatprep.subr.bf16.mxu0 0
        %365 = vmatpush2.bf16.msra.mxu0 0
        %366 = vmatprep.subr.bf16.mxu0 0
        %367 = vmatpush2.bf16.msra.mxu0 0
        %368 = vmatprep.subr.bf16.mxu0 0
        %369 = vmatpush2.bf16.msra.mxu0 0
        %370 = vmatprep.subr.bf16.mxu0 0
        %371 = vmatpush2.bf16.msra.mxu0 0
        %372 = vmatprep.subr.bf16.mxu0 0
        %373 = vmatpush2.bf16.msra.mxu0 0
        %374 = vmatprep.subr.bf16.mxu0 0
        %375 = vmatpush2.bf16.msra.mxu0 0
        %376 = vmatprep.subr.bf16.mxu0 0
        %377 = vmatpush2.bf16.msra.mxu0 0
        %378 = vmatprep.subr.bf16.mxu0 0
        %379 = vmatpush2.bf16.msra.mxu0 0
        %380 = vmatprep.mubr.bf16.mxu0 0
        %381 = vmatmul.mubr.bf16.gmra.mxu0 %v346
        %v382 = vpop.f32.mrf.mxu0
        %v383 = vadd.f32 %v331, %v382
        %v384 = vpop.f32.mrf.mxu0
        %v385 = vpop.f32.mrf.mxu0
        %v386 = vpop.f32.mrf.mxu0
        %387 = vdwg.mxu0
        %v388 = vmax.f32 %v383, 0.0
        %v389 = vrot.slane %v388, 4
        %v390 = vadd.f32 %v388, %v389
        %v391 = vrot.slane %v390, 2
        %v392 = vadd.f32 %v390, %v391
        %v393 = vrot.slane %v392, 1
        %v394 = vadd.f32 %v392, %v393
        %v395 = vrcp.pop 8.0
        %v396 = vmul.f32 %v394, %v395
        %v397 = vmul.f32 %v388, %v388
        %v398 = vrot.slane %v397, 4
        %v399 = vadd.f32 %v397, %v398
        %v400 = vrot.slane %v399, 2
        %v401 = vadd.f32 %v399, %v400
        %v402 = vrot.slane %v401, 1
        %v403 = vadd.f32 %v401, %v402
        %v404 = vmul.f32 %v403, %v395
        %v405 = vmul.f32 %v396, %v396
        %v406 = vsub.f32 %v404, %v405
        %v407 = vmax.f32 %v406, 0.0
        %v408 = vadd.f32 %v407, 1e-05
        %v409 = vrsqrt.pop %v408
        %v410 = vmul.f32 %v326, %v409
        %v411 = vsub.f32 %v388, %v396
        %v412 = vlaneseq
        %v413 = vshrl.u32 %v412, 7
        %v414 = vsub.s32 0, %v413
        %v415 = vrot.slane %v410, %v414
        %v416 = vmul.f32 %v411, %v415
        %v417 = vlaneseq
        %v418 = vshrl.u32 %v417, 7
        %v419 = vsub.s32 0, %v418
        %v420 = vrot.slane %v327, %v419
        %v421 = vadd.f32 %v416, %v420
        %v422 = vld [vmem:[#allocation3] sm:$0xff]
        %v423 = vpack.c.bf16 %v421, %v421
        %v424 = vld [vmem:[%s303] sm:$0xf]
        %v425 = vld [vmem:[%s303 + $0x4] sm:$0xf]
        %v426 = vld [vmem:[%s303 + $0x8] sm:$0xf]
        %v427 = vld [vmem:[%s303 + $0xc] sm:$0xf]
        %v428 = vld [vmem:[%s303 + $0x10] sm:$0xf]
        %v429 = vld [vmem:[%s303 + $0x14] sm:$0xf]
        %v430 = vld [vmem:[%s303 + $0x18] sm:$0xf]
        %v431 = vld [vmem:[%s303 + $0x1c] sm:$0xf]
        %v432 = vld [vmem:[%s303 + $0x20] sm:$0xf]
        %v433 = vld [vmem:[%s303 + $0x24] sm:$0xf]
        %v434 = vld [vmem:[%s303 + $0x28] sm:$0xf]
        %v435 = vld [vmem:[%s303 + $0x2c] sm:$0xf]
        %v436 = vld [vmem:[%s303 + $0x30] sm:$0xf]
        %v437 = vld [vmem:[%s303 + $0x34] sm:$0xf]
        %v438 = vld [vmem:[%s303 + $0x38] sm:$0xf]
        %v439 = vld [vmem:[%s303 + $0x3c] sm:$0xf]
        %v456 = vunpack.c.l.b16 %v424
        %v457 = vunpack.c.l.b16 %v425
        %v458 = vunpack.c.l.b16 %v426
        %v459 = vunpack.c.l.b16 %v427
        %v460 = vunpack.c.l.b16 %v428
        %v461 = vunpack.c.l.b16 %v429
        %v462 = vunpack.c.l.b16 %v430
        %v463 = vunpack.c.l.b16 %v431
        %v464 = vunpack.c.l.b16 %v432
        %v465 = vunpack.c.l.b16 %v433
        %v466 = vunpack.c.l.b16 %v434
        %v467 = vunpack.c.l.b16 %v435
        %v468 = vunpack.c.l.b16 %v436
        %v469 = vunpack.c.l.b16 %v437
        %v470 = vunpack.c.l.b16 %v438
        %v471 = vunpack.c.l.b16 %v439
        %v472 = vpack.c.b16 %v457, %v456
        %v473 = vpack.c.b16 %v459, %v458
        %v474 = vpack.c.b16 %v461, %v460
        %v475 = vpack.c.b16 %v463, %v462
        %v476 = vpack.c.b16 %v465, %v464
        %v477 = vpack.c.b16 %v467, %v466
        %v478 = vpack.c.b16 %v469, %v468
        %v479 = vpack.c.b16 %v471, %v470
        %488 = vmatprep.subr.bf16.mxu0 0
        %489 = vmatpush1.bf16.msra.mxu0 %v479
        %490 = vmatprep.subr.bf16.mxu0 0
        %491 = vmatpush1.bf16.msra.mxu0 %v478
        %492 = vmatprep.subr.bf16.mxu0 0
        %493 = vmatpush1.bf16.msra.mxu0 %v477
        %494 = vmatprep.subr.bf16.mxu0 0
        %495 = vmatpush1.bf16.msra.mxu0 %v476
        %496 = vmatprep.subr.bf16.mxu0 0
        %497 = vmatpush1.bf16.msra.mxu0 %v475
        %498 = vmatprep.subr.bf16.mxu0 0
        %499 = vmatpush1.bf16.msra.mxu0 %v474
        %500 = vmatprep.subr.bf16.mxu0 0
        %501 = vmatpush1.bf16.msra.mxu0 %v473
        %502 = vmatprep.subr.bf16.mxu0 0
        %503 = vmatpush1.bf16.msra.mxu0 %v472
        %504 = vmatprep.subr.bf16.mxu0 0
        %505 = vmatpush2.bf16.msra.mxu0 0
        %506 = vmatprep.subr.bf16.mxu0 0
        %507 = vmatpush2.bf16.msra.mxu0 0
        %508 = vmatprep.subr.bf16.mxu0 0
        %509 = vmatpush2.bf16.msra.mxu0 0
        %510 = vmatprep.subr.bf16.mxu0 0
        %511 = vmatpush2.bf16.msra.mxu0 0
        %512 = vmatprep.subr.bf16.mxu0 0
        %513 = vmatpush2.bf16.msra.mxu0 0
        %514 = vmatprep.subr.bf16.mxu0 0
        %515 = vmatpush2.bf16.msra.mxu0 0
        %516 = vmatprep.subr.bf16.mxu0 0
        %517 = vmatpush2.bf16.msra.mxu0 0
        %518 = vmatprep.subr.bf16.mxu0 0
        %519 = vmatpush2.bf16.msra.mxu0 0
        %520 = vmatprep.mubr.bf16.mxu0 0
        %521 = vmatmul.mubr.bf16.gmra.mxu0 %v423
        %v522 = vpop.f32.mrf.mxu0
        %v523 = vadd.f32 0.0, %v522
        %v524 = vpop.f32.mrf.mxu0
        %v525 = vpop.f32.mrf.mxu0
        %v526 = vpop.f32.mrf.mxu0
        %527 = vdwg.mxu0
        %v528 = vadd.f32 %v422, %v523
        %529 = vst.msk [vmem:[#allocation3] sm:$0xff] %vm344, %v528
        // Predicated region
        $region86: #{tpu_custom_call.1} parent=76 // pred_check
          %p530 = pneg %p150
        $region87: #{tpu_custom_call.1} parent=76 // pred_check_branch
          %532 = sbr.rel (%p530) target = $region89
        $region88: #{tpu_custom_call.1} parent=76 // pred_region
          %s534 = ssub.s32 128, 128
          %535 = vsyncadd [#allocation4], %s534
          %s537 = sshll.u32 [#allocation3], 4
          %s538 = int_to_ptr.vmem [resolvable:$true] %s537
          %540 = dma.vmem_to_hbm [thread:$0]  %s538, 128, %s5, [#allocation4]
        $region89: #{tpu_custom_call.1} parent=76 // pred_fallthru
          _
        // Predicated region
        $region90: #{tpu_custom_call.1} parent=76 // pred_check
          %p541 = pneg %p150
        $region91: #{tpu_custom_call.1} parent=76 // pred_check_branch
          %543 = sbr.rel (%p541) target = $region93
        $region92: #{tpu_custom_call.1} parent=76 // pred_region
          %544 = dma.done [#allocation4], 128
        $region93: #{tpu_custom_call.1} parent=76 // pred_fallthru
          _
      $region77: #{tpu_custom_call.1} parent=5 // pred_fallthru
        _
      %p545 = scmp.le.s32.totalorder 2, %s12
      // Predicated region
      $region94: #{tpu_custom_call.1} parent=5 // pred_check
        %p546 = pneg %p545
      $region95: #{tpu_custom_call.1} parent=5 // pred_check_branch
        %548 = sbr.rel (%p546) target = $region97
      $region96: #{tpu_custom_call.1} parent=5 // pred_region
        %s549 = ssub.s32 %s12, 2
      $region97: #{tpu_custom_call.1} parent=5 // pred_fallthru
        _
    $region6: #{tpu_custom_call.1} parent=1 // loop_footer
      %s16 = sadd.s32 1, %s12
    $region7: #{tpu_custom_call.1} parent=1 // loop_footer_branch
      %11 = sbr.rel target = $region3
    $region8: #{tpu_custom_call.1} parent=1 // loop_exit
      _
    %550 = vsyncpa [#allocation4], 1
    %s551 = scalar_lea.sflag [#allocation4], 1
    %552 = vsyncpa %s551, 1

</llo_original>
